<compile_context>
chip_gen: v5e
topology: v5e:2x2
jax: 0.10.0
libtpu: 0.0.40
codegen_flags: <defaults>
</compile_context>

<pallas_src>
import functools

import jax
import jax.numpy as jnp
from jax import lax
from jax.experimental import pallas as pl
from jax.experimental.pallas import tpu as pltpu

EPS = 1e-4  # clamp value used by normalize_attn_weights / incremental_rfa


def _round_up(x, m):
    return ((x + m - 1) // m) * m


def _pick_heads_per_group(num_heads, head_dim):
    """Smallest divisor g of num_heads with (g * head_dim) % 128 == 0, else all."""
    for g in range(1, num_heads):
        if num_heads % g == 0 and (g * head_dim) % 128 == 0:
            return g
    return num_heads


# ----------------------------------------------------------------------------
# Pallas kernel: one (batch, head-group, chunk) step of chunked causal RFA.
# ----------------------------------------------------------------------------
def _rfa_chunk_kernel(phi_q_ref, phi_k_ref, va_ref, out_ref, s_ref, *,
                      dh, sub_block, use_ones_col, approx_recip):
    # phi_q_ref, phi_k_ref : (1, g, C, K)        K = 2 * proj_dim
    # va_ref               : (1, g, C, da_in)    da_in = da_pad (ones-col) or dh
    # out_ref              : (1, C, g * dh)      lane-dense multi-head output
    # s_ref                : (g, K, da_pad)      f32 running prefix state
    #                        ones-col path : full [S | 1-col | 0-pad] state
    #                        sep-z path    : cols [0:dh] = S, col dh = z
    ci = pl.program_id(2)

    @pl.when(ci == 0)
    def _():
        s_ref[...] = jnp.zeros_like(s_ref)

    g = phi_q_ref.shape[1]
    c = phi_q_ref.shape[2]
    sb = sub_block
    nb = c // sb
    cdt = phi_q_ref.dtype

    # Intra-sub-block causal mask (sb x sb), shared by all heads / diag blocks.
    row = lax.broadcasted_iota(jnp.int32, (sb, sb), 0)
    col = lax.broadcasted_iota(jnp.int32, (sb, sb), 1)
    causal = col <= row

    head_outs = []
    for h in range(g):
        if use_ones_col:
            s_prev = s_ref[h]                          # [K, da_pad] f32
        else:
            s_prev = s_ref[h, :, :dh]                  # [K, dh]     f32
            z_prev = s_ref[h, :, dh:dh + 1]            # [K, 1]      f32
            z_prev_c = z_prev.astype(cdt)
        # TODO(synk): s_prev is cast to bf16 for the inter-chunk matmul; switch
        # this (small) matmul to f32 operands if long-sequence drift shows up.
        s_prev_c = s_prev.astype(cdt)

        blk_outs = []
        for qi in range(nb):
            qs = phi_q_ref[0, h, qi * sb:(qi + 1) * sb, :]        # [sb, K]
            # Inter-chunk term from the running prefix state.
            acc = jnp.dot(qs, s_prev_c,
                          preferred_element_type=jnp.float32)     # [sb, da]
            if use_ones_col:
                den = None
            else:
                den = jnp.dot(qs, z_prev_c,
                              preferred_element_type=jnp.float32)  # [sb, 1]
            # Intra-chunk causal scores, sub-blocked: only the diagonal block
            # is masked; blocks above the diagonal are skipped entirely.
            for kj in range(qi + 1):
                ks = phi_k_ref[0, h, kj * sb:(kj + 1) * sb, :]    # [sb, K]
                w = lax.dot_general(qs, ks, (((1,), (1,)), ((), ())),
                                    preferred_element_type=jnp.float32)
                if kj == qi:
                    w = jnp.where(causal, w, 0.0)
                if not use_ones_col:
                    den = den + jnp.sum(w, axis=-1, keepdims=True)
                acc = acc + jnp.dot(
                    w.astype(cdt), va_ref[0, h, kj * sb:(kj + 1) * sb, :],
                    preferred_element_type=jnp.float32)
            if use_ones_col:
                num, den = acc[:, :dh], acc[:, dh:dh + 1]
            else:
                num = acc
            den = jnp.maximum(den, EPS)
            if approx_recip:
                o = num * pl.reciprocal(den, approx=True)
            else:
                o = num / den
            # Cast each sub-block to the output dtype before concatenation.
            blk_outs.append(o.astype(out_ref.dtype))
        head_outs.append(blk_outs[0] if nb == 1
                         else jnp.concatenate(blk_outs, axis=0))

        # Fold this chunk's keys / values into the running prefix state (f32).
        k_full = phi_k_ref[0, h]                                   # [C, K]
        va_full = va_ref[0, h]                                     # [C, da_in]
        s_upd = lax.dot_general(k_full, va_full, (((0,), (0,)), ((), ())),
                                preferred_element_type=jnp.float32)
        if use_ones_col:
            s_ref[h] = s_prev + s_upd
        else:
            s_ref[h, :, :dh] = s_prev + s_upd
            ones_col = jnp.ones((c, 1), cdt)
            z_upd = lax.dot_general(k_full, ones_col, (((0,), (0,)), ((), ())),
                                    preferred_element_type=jnp.float32)
            s_ref[h, :, dh:dh + 1] = z_prev + z_upd

    # Single unmasked, lane-dense (C, g*dh) store.
    out_ref[0] = (head_outs[0] if g == 1
                  else jnp.concatenate(head_outs, axis=-1))


def causal_rfa_pallas(phi_q, phi_k, v, *, chunk=256,
                      compute_dtype=jnp.bfloat16):
    """Causal RFA.

    phi_q, phi_k: [B, H, T, 2*proj_dim]; v: [B, H, T, head_dim]
    Returns attn: [B, T, H * head_dim] (compute_dtype).
    """
    b, h, t, kdim = phi_q.shape
    dh = v.shape[-1]
    approx_recip = compute_dtype != jnp.float32

    # Value-augmentation layout (see header comment).
    use_ones_col = (dh % 128) != 0
    da_pad = _round_up(dh + 1, 128)
    if use_ones_col:
        va = jnp.concatenate([v, jnp.ones_like(v[..., :1])], axis=-1)
        if da_pad > dh + 1:
            va = jnp.pad(va, ((0, 0), (0, 0), (0, 0), (0, da_pad - dh - 1)))
    else:
        va = v  # dh already a multiple of 128; denominator kept separately.

    phi_q = phi_q.astype(compute_dtype)
    phi_k = phi_k.astype(compute_dtype)
    va = va.astype(compute_dtype)

    # Chunk the sequence; pad T to a multiple of the chunk (zero phi_k / v rows
    # contribute nothing to the state; padded query rows are sliced off below).
    if _round_up(t, 8) <= chunk:           # short sequence: single chunk
        chunk = _round_up(t, 8)
        sb = chunk
    else:
        chunk = _round_up(chunk, 128)      # chunk=256 default; v5e may prefer 128
        sb = 128
    t_pad = _round_up(t, chunk)
    if t_pad != t:
        pad = ((0, 0), (0, 0), (0, t_pad - t), (0, 0))
        phi_q = jnp.pad(phi_q, pad)
        phi_k = jnp.pad(phi_k, pad)
        va = jnp.pad(va, pad)
    num_chunks = t_pad // chunk
    da_in = va.shape[-1]

    g = _pick_heads_per_group(h, dh)
    num_groups = h // g

    out = pl.pallas_call(
        functools.partial(_rfa_chunk_kernel, dh=dh, sub_block=sb,
                          use_ones_col=use_ones_col, approx_recip=approx_recip),
        out_shape=jax.ShapeDtypeStruct((b, t_pad, h * dh), compute_dtype),
        grid=(b, num_groups, num_chunks),
        in_specs=[
            pl.BlockSpec((1, g, chunk, kdim), lambda i, gi, ci: (i, gi, ci, 0)),
            pl.BlockSpec((1, g, chunk, kdim), lambda i, gi, ci: (i, gi, ci, 0)),
            pl.BlockSpec((1, g, chunk, da_in), lambda i, gi, ci: (i, gi, ci, 0)),
        ],
        out_specs=pl.BlockSpec((1, chunk, g * dh), lambda i, gi, ci: (i, ci, gi)),
        scratch_shapes=[pltpu.VMEM((g, kdim, da_pad), jnp.float32)],
        compiler_params=pltpu.CompilerParams(
            dimension_semantics=("parallel", "parallel", "arbitrary")),
    )(phi_q, phi_k, va)
    return out[:, :t, :]


# ----------------------------------------------------------------------------
# Module glue (plain JAX): projections + random feature map + output proj.
# ----------------------------------------------------------------------------
def xavier_uniform(key, shape, gain=1.0):
    fan_out, fan_in = shape
    limit = gain * (6.0 / (fan_in + fan_out)) ** 0.5
    return jax.random.uniform(key, shape, jnp.float32, -limit, limit)


def init_params(key, embed_dim, num_heads, proj_dim):
    head_dim = embed_dim // num_heads
    ks = jax.random.split(key, 8)
    gain = 1.0  # args.init_scale ** -0.5 with init_scale = 1.0
    bound = embed_dim ** -0.5
    return {
        "q_w": xavier_uniform(ks[0], (embed_dim, embed_dim), gain),
        "k_w": xavier_uniform(ks[1], (embed_dim, embed_dim), gain),
        "v_w": xavier_uniform(ks[2], (embed_dim, embed_dim), gain),
        "o_w": xavier_uniform(ks[3], (embed_dim, embed_dim), gain),
        "q_b": jax.random.uniform(ks[4], (embed_dim,), jnp.float32, -bound, bound),
        "k_b": jax.random.uniform(ks[5], (embed_dim,), jnp.float32, -bound, bound),
        "v_b": jax.random.uniform(ks[6], (embed_dim,), jnp.float32, -bound, bound),
        "o_b": jnp.zeros((embed_dim,), jnp.float32),
        # random_matrices is an *input* of the module's forward; a modest scale
        # keeps the RFA denominators well conditioned for the demo.
        "random_matrices": 0.2 * jax.random.normal(
            ks[7], (num_heads, proj_dim, head_dim), jnp.float32),
        "tau": jnp.float32(1.0),
    }


def _project_heads(x, w, b, num_heads):
    """PyTorch Linear (y = x W^T + b), emitted directly in [B, H, T, Dh] layout."""
    wr = w.reshape(num_heads, -1, w.shape[1])          # [H, Dh, E]
    br = b.reshape(num_heads, -1)                      # [H, Dh]
    return jnp.einsum("tbi,hdi->bhtd", x, wr) + br[None, :, None, :]


def random_project(x, random_matrices, proj_dim):
    """Trig random-feature map: phi(x) = P^{-1/2} [sin(xW^T), cos(xW^T)].

    x: [B, H, T, Dh]; random_matrices: [H, P, Dh] -> [B, H, T, 2P].
    Sizing note: prefer 2P to be a multiple of 256 on v6e/v7x (128 on v5e) so
    the q.k^T / q.S contractions fill the MXU depth (no kernel change needed).
    """
    z = jnp.einsum("bhtd,hkd->bhtk", x, random_matrices)
    return jnp.concatenate([jnp.sin(z), jnp.cos(z)], axis=-1) * (proj_dim ** -0.5)


def _prepare_phi_v(params, x, num_heads):
    _, _, embed_dim = x.shape
    head_dim = embed_dim // num_heads
    proj_dim = params["random_matrices"].shape[1]
    q = _project_heads(x, params["q_w"], params["q_b"], num_heads)
    k = _project_heads(x, params["k_w"], params["k_b"], num_heads)
    v = _project_heads(x, params["v_w"], params["v_b"], num_heads)
    rm = params["random_matrices"] / params["tau"]      # build_random_matrices
    q = q * (head_dim ** -0.5)                          # scaling applied to q
    phi_q = random_project(q, rm, proj_dim)             # [B, H, T, 2P]
    phi_k = random_project(k, rm, proj_dim)
    # TODO(synk): use_input_gate / learned_tau / reparam_proj / 'mlp' feature-map
    # branches and key_padding_mask are disabled (module defaults / None).
    return phi_q, phi_k, v


@functools.partial(jax.jit, static_argnames=("num_heads", "chunk", "compute_dtype"))
def causal_attention_forward(params, x, *, num_heads, chunk=256,
                             compute_dtype=jnp.bfloat16):
    """x: [tgt_len, bsz, embed_dim] -> attn: [tgt_len, bsz, embed_dim]."""
    phi_q, phi_k, v = _prepare_phi_v(params, x, num_heads)
    attn = causal_rfa_pallas(phi_q, phi_k, v, chunk=chunk,
                             compute_dtype=compute_dtype)      # [B, T, E]
    # TODO(synk): attention dropout skipped (training=False path).
    # Output projection with the [B,T,E] -> [T,B,E] layout change folded in.
    return (jnp.einsum("bte,fe->tbf", attn.astype(x.dtype), params["o_w"])
            + params["o_b"])


# ----------------------------------------------------------------------------
# Pure-JAX references of the masked_rfa hot path (for sanity checks).
# ----------------------------------------------------------------------------
def _rfa_reference(phi_q, phi_k, v):
    """phi_*: [B,H,T,K], v: [B,H,T,D] -> [B, T, H*D]."""
    w = jnp.einsum("bhtk,bhsk->bhts", phi_q, phi_k)
    t = w.shape[-1]
    w = jnp.where(jnp.tril(jnp.ones((t, t), bool)), w, 0.0)
    denom = jnp.maximum(jnp.sum(w, axis=-1, keepdims=True), EPS)
    o = jnp.einsum("bhts,bhsd->bhtd", w / denom, v)
    b, h, tt, d = o.shape
    return o.transpose(0, 2, 1, 3).reshape(b, tt, h * d)


def _forward_reference(params, x, num_heads):
    phi_q, phi_k, v = _prepare_phi_v(params, x, num_heads)
    attn = _rfa_reference(phi_q, phi_k, v)
    return jnp.einsum("bte,fe->tbf", attn, params["o_w"]) + params["o_b"]


if __name__ == "__main__":
    # Small shapes consistent with the module.
    tgt_len, bsz, embed_dim = 8, 2, 32
    num_heads = 4                                # head_dim = 8
    proj_dim = 16                                # causal_proj_dim -> 2P = 32

    root = jax.random.PRNGKey(0)
    kx, kp, k1, k2, k3 = jax.random.split(root, 5)
    x = jax.random.normal(kx, (tgt_len, bsz, embed_dim), jnp.float32)
    params = init_params(kp, embed_dim, num_heads, proj_dim)

    # Production path: bf16 operands, f32 accumulation / state.
    out = causal_attention_forward(params, x, num_heads=num_heads,
                                   compute_dtype=jnp.bfloat16)
    out = jax.block_until_ready(out)
    assert out.shape == (tgt_len, bsz, embed_dim)
    assert bool(jnp.all(jnp.isfinite(out.astype(jnp.float32))))

    # Exactness: f32 kernel (ones-column path, head_dim % 128 != 0) vs reference.
    phi_q, phi_k, v = _prepare_phi_v(params, x, num_heads)
    got = causal_rfa_pallas(phi_q, phi_k, v, compute_dtype=jnp.float32)
    want = _rfa_reference(phi_q, phi_k, v)
    assert jnp.allclose(got, want, atol=1e-2, rtol=1e-2), \
        float(jnp.max(jnp.abs(got - want)))

    # Exactness: f32 kernel, separate-z path (head_dim % 128 == 0), with T
    # padding exercised (T=12 -> chunk 16).
    b2, h2, t2, dh2, k2dim = 1, 2, 12, 128, 32
    phi_q2 = jax.random.uniform(k1, (b2, h2, t2, k2dim), jnp.float32, 0.05, 1.0)
    phi_k2 = jax.random.uniform(k2, (b2, h2, t2, k2dim), jnp.float32, 0.05, 1.0)
    v2 = jax.random.normal(k3, (b2, h2, t2, dh2), jnp.float32)
    got2 = causal_rfa_pallas(phi_q2, phi_k2, v2, compute_dtype=jnp.float32)
    want2 = _rfa_reference(phi_q2, phi_k2, v2)
    assert jnp.allclose(got2, want2, atol=1e-2, rtol=1e-2), \
        float(jnp.max(jnp.abs(got2 - want2)))

    # End-to-end f32 forward vs pure-JAX reference forward.
    out_f32 = causal_attention_forward(params, x, num_heads=num_heads,
                                       compute_dtype=jnp.float32)
    ref = _forward_reference(params, x, num_heads)
    assert jnp.allclose(out_f32, ref, atol=1e-2, rtol=1e-2), \
        float(jnp.max(jnp.abs(out_f32 - ref)))

    print("KERNEL_OK")
</pallas_src>

<mosaic_0001>
module attributes {stable_mosaic.version = 11 : i64} {
  func.func @_rfa_chunk_kernel(%arg0: i32, %arg1: i32, %arg2: i32, %arg3: memref<1x4x8x32xbf16, #tpu.memory_space<vmem>>, %arg4: memref<1x4x8x32xbf16, #tpu.memory_space<vmem>>, %arg5: memref<1x4x8x128xbf16, #tpu.memory_space<vmem>>, %arg6: memref<1x8x32xbf16, #tpu.memory_space<vmem>>, %arg7: memref<4x32x128xf32, #tpu.memory_space<vmem>>) attributes {dimension_semantics = [#tpu.dimension_semantics<parallel>, #tpu.dimension_semantics<parallel>, #tpu.dimension_semantics<arbitrary>], iteration_bounds = array<i64: 2, 1, 1>, scalar_prefetch = 0 : i64, scratch_operands = 1 : i64, tpu.core_type = #tpu.core_type<tc>, window_params = [{transform_indices = @transform_0, window_bounds = array<i64: 1, 4, 8, 32>}, {transform_indices = @transform_1, window_bounds = array<i64: 1, 4, 8, 32>}, {transform_indices = @transform_2, window_bounds = array<i64: 1, 4, 8, 128>}, {transform_indices = @transform_3, window_bounds = array<i64: 1, 8, 32>}]} {
    %c0_i32 = arith.constant 0 : i32
    %0 = arith.cmpi eq, %arg2, %c0_i32 : i32
    %1 = arith.extui %0 : i1 to i32
    %c0_i32_0 = arith.constant 0 : i32
    %2 = arith.cmpi ne, %1, %c0_i32_0 : i32
    scf.if %2 {
      %cst_127 = arith.constant 0.000000e+00 : f32
      %142 = vector.broadcast %cst_127 : f32 to vector<4x32x128xf32>
      %c0_128 = arith.constant 0 : index
      %c0_129 = arith.constant 0 : index
      %c0_130 = arith.constant 0 : index
      %143 = vector.load %arg7[%c0_128, %c0_129, %c0_130] : memref<4x32x128xf32, #tpu.memory_space<vmem>>, vector<4x32x128xf32>
      tpu.vector_store %arg7[%c0_128, %c0_129, %c0_130], %142 {strides = array<i32>} : memref<4x32x128xf32, #tpu.memory_space<vmem>>, vector<4x32x128xf32>,
    } else {
    }
    %3 = tpu.iota {dimensions = array<i32: 0>} : vector<8x8xi32>
    %4 = tpu.iota {dimensions = array<i32: 1>} : vector<8x8xi32>
    %5 = arith.cmpi sle, %4, %3 : vector<8x8xi32>
    %c0 = arith.constant 0 : index
    %c0_1 = arith.constant 0 : index
    %c0_2 = arith.constant 0 : index
    %6 = vector.load %arg7[%c0, %c0_1, %c0_2] : memref<4x32x128xf32, #tpu.memory_space<vmem>>, vector<1x32x128xf32>
    %7 = vector.shape_cast %6 : vector<1x32x128xf32> to vector<32x128xf32>
    %8 = arith.truncf %7 : vector<32x128xf32> to vector<32x128xbf16>
    %c0_3 = arith.constant 0 : index
    %c0_4 = arith.constant 0 : index
    %c0_5 = arith.constant 0 : index
    %c0_6 = arith.constant 0 : index
    %9 = vector.load %arg3[%c0_3, %c0_4, %c0_5, %c0_6] : memref<1x4x8x32xbf16, #tpu.memory_space<vmem>>, vector<1x1x8x32xbf16>
    %10 = vector.shape_cast %9 : vector<1x1x8x32xbf16> to vector<8x32xbf16>
    %cst = arith.constant dense<0.000000e+00> : vector<8x128xf32>
    %11 = tpu.matmul %10, %8, %cst {dimension_numbers = #tpu.dot_dimension_numbers<[1], [0], [0], [1], [0, 0, 1, 1], [], []>} : vector<8x32xbf16>, vector<32x128xbf16>, vector<8x128xf32> -> vector<8x128xf32>
    %c0_7 = arith.constant 0 : index
    %c0_8 = arith.constant 0 : index
    %c0_9 = arith.constant 0 : index
    %c0_10 = arith.constant 0 : index
    %12 = vector.load %arg4[%c0_7, %c0_8, %c0_9, %c0_10] : memref<1x4x8x32xbf16, #tpu.memory_space<vmem>>, vector<1x1x8x32xbf16>
    %13 = vector.shape_cast %12 : vector<1x1x8x32xbf16> to vector<8x32xbf16>
    %cst_11 = arith.constant dense<0.000000e+00> : vector<8x8xf32>
    %14 = tpu.matmul %10, %13, %cst_11 {dimension_numbers = #tpu.dot_dimension_numbers<[1], [1], [0], [0], [0, 0, 1, 0], [], []>} : vector<8x32xbf16>, vector<8x32xbf16>, vector<8x8xf32> -> vector<8x8xf32>
    %cst_12 = arith.constant 0.000000e+00 : f32
    %15 = vector.broadcast %cst_12 : f32 to vector<8x8xf32>
    %16 = arith.select %5, %14, %15 : vector<8x8xi1>, vector<8x8xf32>
    %17 = arith.truncf %16 : vector<8x8xf32> to vector<8x8xbf16>
    %c0_13 = arith.constant 0 : index
    %c0_14 = arith.constant 0 : index
    %c0_15 = arith.constant 0 : index
    %c0_16 = arith.constant 0 : index
    %18 = vector.load %arg5[%c0_13, %c0_14, %c0_15, %c0_16] : memref<1x4x8x128xbf16, #tpu.memory_space<vmem>>, vector<1x1x8x128xbf16>
    %19 = vector.shape_cast %18 : vector<1x1x8x128xbf16> to vector<8x128xbf16>
    %cst_17 = arith.constant dense<0.000000e+00> : vector<8x128xf32>
    %20 = tpu.matmul %17, %19, %cst_17 {dimension_numbers = #tpu.dot_dimension_numbers<[1], [0], [0], [1], [0, 0, 1, 1], [], []>} : vector<8x8xbf16>, vector<8x128xbf16>, vector<8x128xf32> -> vector<8x128xf32>
    %21 = arith.addf %11, %20 : vector<8x128xf32>
    %22 = vector.extract_strided_slice %21 {offsets = [0, 0], sizes = [8, 8], strides = [1, 1]} : vector<8x128xf32> to vector<8x8xf32>
    %23 = vector.extract_strided_slice %21 {offsets = [0, 8], sizes = [8, 1], strides = [1, 1]} : vector<8x128xf32> to vector<8x1xf32>
    %cst_18 = arith.constant 9.99999974E-5 : f32
    %24 = vector.broadcast %cst_18 : f32 to vector<8x1xf32>
    %25 = arith.maximumf %23, %24 : vector<8x1xf32>
    %26 = tpu.reciprocal %25 {approx = true} : vector<8x1xf32> -> vector<8x1xf32>
    %27 = vector.broadcast %26 : vector<8x1xf32> to vector<8x8xf32>
    %28 = arith.mulf %22, %27 : vector<8x8xf32>
    %29 = arith.truncf %28 : vector<8x8xf32> to vector<8x8xbf16>
    %c0_19 = arith.constant 0 : index
    %c0_20 = arith.constant 0 : index
    %c0_21 = arith.constant 0 : index
    %c0_22 = arith.constant 0 : index
    %30 = vector.load %arg4[%c0_19, %c0_20, %c0_21, %c0_22] : memref<1x4x8x32xbf16, #tpu.memory_space<vmem>>, vector<1x1x8x32xbf16>
    %31 = vector.shape_cast %30 : vector<1x1x8x32xbf16> to vector<8x32xbf16>
    %c0_23 = arith.constant 0 : index
    %c0_24 = arith.constant 0 : index
    %c0_25 = arith.constant 0 : index
    %c0_26 = arith.constant 0 : index
    %32 = vector.load %arg5[%c0_23, %c0_24, %c0_25, %c0_26] : memref<1x4x8x128xbf16, #tpu.memory_space<vmem>>, vector<1x1x8x128xbf16>
    %33 = vector.shape_cast %32 : vector<1x1x8x128xbf16> to vector<8x128xbf16>
    %cst_27 = arith.constant dense<0.000000e+00> : vector<32x128xf32>
    %34 = tpu.matmul %31, %33, %cst_27 {dimension_numbers = #tpu.dot_dimension_numbers<[0], [0], [1], [1], [0, 1, 1, 1], [], []>} : vector<8x32xbf16>, vector<8x128xbf16>, vector<32x128xf32> -> vector<32x128xf32>
    %35 = arith.addf %7, %34 : vector<32x128xf32>
    %c0_28 = arith.constant 0 : index
    %c0_29 = arith.constant 0 : index
    %c0_30 = arith.constant 0 : index
    %36 = vector.load %arg7[%c0_28, %c0_29, %c0_30] : memref<4x32x128xf32, #tpu.memory_space<vmem>>, vector<1x32x128xf32>
    %37 = vector.shape_cast %36 : vector<1x32x128xf32> to vector<32x128xf32>
    %38 = vector.shape_cast %35 : vector<32x128xf32> to vector<1x32x128xf32>
    tpu.vector_store %arg7[%c0_28, %c0_29, %c0_30], %38 {strides = array<i32>} : memref<4x32x128xf32, #tpu.memory_space<vmem>>, vector<1x32x128xf32>,
    %c1 = arith.constant 1 : index
    %c0_31 = arith.constant 0 : index
    %c0_32 = arith.constant 0 : index
    %39 = vector.load %arg7[%c1, %c0_31, %c0_32] : memref<4x32x128xf32, #tpu.memory_space<vmem>>, vector<1x32x128xf32>
    %40 = vector.shape_cast %39 : vector<1x32x128xf32> to vector<32x128xf32>
    %41 = arith.truncf %40 : vector<32x128xf32> to vector<32x128xbf16>
    %c0_33 = arith.constant 0 : index
    %c1_34 = arith.constant 1 : index
    %c0_35 = arith.constant 0 : index
    %c0_36 = arith.constant 0 : index
    %42 = vector.load %arg3[%c0_33, %c1_34, %c0_35, %c0_36] : memref<1x4x8x32xbf16, #tpu.memory_space<vmem>>, vector<1x1x8x32xbf16>
    %43 = vector.shape_cast %42 : vector<1x1x8x32xbf16> to vector<8x32xbf16>
    %cst_37 = arith.constant dense<0.000000e+00> : vector<8x128xf32>
    %44 = tpu.matmul %43, %41, %cst_37 {dimension_numbers = #tpu.dot_dimension_numbers<[1], [0], [0], [1], [0, 0, 1, 1], [], []>} : vector<8x32xbf16>, vector<32x128xbf16>, vector<8x128xf32> -> vector<8x128xf32>
    %c0_38 = arith.constant 0 : index
    %c1_39 = arith.constant 1 : index
    %c0_40 = arith.constant 0 : index
    %c0_41 = arith.constant 0 : index
    %45 = vector.load %arg4[%c0_38, %c1_39, %c0_40, %c0_41] : memref<1x4x8x32xbf16, #tpu.memory_space<vmem>>, vector<1x1x8x32xbf16>
    %46 = vector.shape_cast %45 : vector<1x1x8x32xbf16> to vector<8x32xbf16>
    %cst_42 = arith.constant dense<0.000000e+00> : vector<8x8xf32>
    %47 = tpu.matmul %43, %46, %cst_42 {dimension_numbers = #tpu.dot_dimension_numbers<[1], [1], [0], [0], [0, 0, 1, 0], [], []>} : vector<8x32xbf16>, vector<8x32xbf16>, vector<8x8xf32> -> vector<8x8xf32>
    %cst_43 = arith.constant 0.000000e+00 : f32
    %48 = vector.broadcast %cst_43 : f32 to vector<8x8xf32>
    %49 = arith.select %5, %47, %48 : vector<8x8xi1>, vector<8x8xf32>
    %50 = arith.truncf %49 : vector<8x8xf32> to vector<8x8xbf16>
    %c0_44 = arith.constant 0 : index
    %c1_45 = arith.constant 1 : index
    %c0_46 = arith.constant 0 : index
    %c0_47 = arith.constant 0 : index
    %51 = vector.load %arg5[%c0_44, %c1_45, %c0_46, %c0_47] : memref<1x4x8x128xbf16, #tpu.memory_space<vmem>>, vector<1x1x8x128xbf16>
    %52 = vector.shape_cast %51 : vector<1x1x8x128xbf16> to vector<8x128xbf16>
    %cst_48 = arith.constant dense<0.000000e+00> : vector<8x128xf32>
    %53 = tpu.matmul %50, %52, %cst_48 {dimension_numbers = #tpu.dot_dimension_numbers<[1], [0], [0], [1], [0, 0, 1, 1], [], []>} : vector<8x8xbf16>, vector<8x128xbf16>, vector<8x128xf32> -> vector<8x128xf32>
    %54 = arith.addf %44, %53 : vector<8x128xf32>
    %55 = vector.extract_strided_slice %54 {offsets = [0, 0], sizes = [8, 8], strides = [1, 1]} : vector<8x128xf32> to vector<8x8xf32>
    %56 = vector.extract_strided_slice %54 {offsets = [0, 8], sizes = [8, 1], strides = [1, 1]} : vector<8x128xf32> to vector<8x1xf32>
    %cst_49 = arith.constant 9.99999974E-5 : f32
    %57 = vector.broadcast %cst_49 : f32 to vector<8x1xf32>
    %58 = arith.maximumf %56, %57 : vector<8x1xf32>
    %59 = tpu.reciprocal %58 {approx = true} : vector<8x1xf32> -> vector<8x1xf32>
    %60 = vector.broadcast %59 : vector<8x1xf32> to vector<8x8xf32>
    %61 = arith.mulf %55, %60 : vector<8x8xf32>
    %62 = arith.truncf %61 : vector<8x8xf32> to vector<8x8xbf16>
    %c0_50 = arith.constant 0 : index
    %c1_51 = arith.constant 1 : index
    %c0_52 = arith.constant 0 : index
    %c0_53 = arith.constant 0 : index
    %63 = vector.load %arg4[%c0_50, %c1_51, %c0_52, %c0_53] : memref<1x4x8x32xbf16, #tpu.memory_space<vmem>>, vector<1x1x8x32xbf16>
    %64 = vector.shape_cast %63 : vector<1x1x8x32xbf16> to vector<8x32xbf16>
    %c0_54 = arith.constant 0 : index
    %c1_55 = arith.constant 1 : index
    %c0_56 = arith.constant 0 : index
    %c0_57 = arith.constant 0 : index
    %65 = vector.load %arg5[%c0_54, %c1_55, %c0_56, %c0_57] : memref<1x4x8x128xbf16, #tpu.memory_space<vmem>>, vector<1x1x8x128xbf16>
    %66 = vector.shape_cast %65 : vector<1x1x8x128xbf16> to vector<8x128xbf16>
    %cst_58 = arith.constant dense<0.000000e+00> : vector<32x128xf32>
    %67 = tpu.matmul %64, %66, %cst_58 {dimension_numbers = #tpu.dot_dimension_numbers<[0], [0], [1], [1], [0, 1, 1, 1], [], []>} : vector<8x32xbf16>, vector<8x128xbf16>, vector<32x128xf32> -> vector<32x128xf32>
    %68 = arith.addf %40, %67 : vector<32x128xf32>
    %c1_59 = arith.constant 1 : index
    %c0_60 = arith.constant 0 : index
    %c0_61 = arith.constant 0 : index
    %69 = vector.load %arg7[%c1_59, %c0_60, %c0_61] : memref<4x32x128xf32, #tpu.memory_space<vmem>>, vector<1x32x128xf32>
    %70 = vector.shape_cast %69 : vector<1x32x128xf32> to vector<32x128xf32>
    %71 = vector.shape_cast %68 : vector<32x128xf32> to vector<1x32x128xf32>
    tpu.vector_store %arg7[%c1_59, %c0_60, %c0_61], %71 {strides = array<i32>} : memref<4x32x128xf32, #tpu.memory_space<vmem>>, vector<1x32x128xf32>,
    %c2 = arith.constant 2 : index
    %c0_62 = arith.constant 0 : index
    %c0_63 = arith.constant 0 : index
    %72 = vector.load %arg7[%c2, %c0_62, %c0_63] : memref<4x32x128xf32, #tpu.memory_space<vmem>>, vector<1x32x128xf32>
    %73 = vector.shape_cast %72 : vector<1x32x128xf32> to vector<32x128xf32>
    %74 = arith.truncf %73 : vector<32x128xf32> to vector<32x128xbf16>
    %c0_64 = arith.constant 0 : index
    %c2_65 = arith.constant 2 : index
    %c0_66 = arith.constant 0 : index
    %c0_67 = arith.constant 0 : index
    %75 = vector.load %arg3[%c0_64, %c2_65, %c0_66, %c0_67] : memref<1x4x8x32xbf16, #tpu.memory_space<vmem>>, vector<1x1x8x32xbf16>
    %76 = vector.shape_cast %75 : vector<1x1x8x32xbf16> to vector<8x32xbf16>
    %cst_68 = arith.constant dense<0.000000e+00> : vector<8x128xf32>
    %77 = tpu.matmul %76, %74, %cst_68 {dimension_numbers = #tpu.dot_dimension_numbers<[1], [0], [0], [1], [0, 0, 1, 1], [], []>} : vector<8x32xbf16>, vector<32x128xbf16>, vector<8x128xf32> -> vector<8x128xf32>
    %c0_69 = arith.constant 0 : index
    %c2_70 = arith.constant 2 : index
    %c0_71 = arith.constant 0 : index
    %c0_72 = arith.constant 0 : index
    %78 = vector.load %arg4[%c0_69, %c2_70, %c0_71, %c0_72] : memref<1x4x8x32xbf16, #tpu.memory_space<vmem>>, vector<1x1x8x32xbf16>
    %79 = vector.shape_cast %78 : vector<1x1x8x32xbf16> to vector<8x32xbf16>
    %cst_73 = arith.constant dense<0.000000e+00> : vector<8x8xf32>
    %80 = tpu.matmul %76, %79, %cst_73 {dimension_numbers = #tpu.dot_dimension_numbers<[1], [1], [0], [0], [0, 0, 1, 0], [], []>} : vector<8x32xbf16>, vector<8x32xbf16>, vector<8x8xf32> -> vector<8x8xf32>
    %cst_74 = arith.constant 0.000000e+00 : f32
    %81 = vector.broadcast %cst_74 : f32 to vector<8x8xf32>
    %82 = arith.select %5, %80, %81 : vector<8x8xi1>, vector<8x8xf32>
    %83 = arith.truncf %82 : vector<8x8xf32> to vector<8x8xbf16>
    %c0_75 = arith.constant 0 : index
    %c2_76 = arith.constant 2 : index
    %c0_77 = arith.constant 0 : index
    %c0_78 = arith.constant 0 : index
    %84 = vector.load %arg5[%c0_75, %c2_76, %c0_77, %c0_78] : memref<1x4x8x128xbf16, #tpu.memory_space<vmem>>, vector<1x1x8x128xbf16>
    %85 = vector.shape_cast %84 : vector<1x1x8x128xbf16> to vector<8x128xbf16>
    %cst_79 = arith.constant dense<0.000000e+00> : vector<8x128xf32>
    %86 = tpu.matmul %83, %85, %cst_79 {dimension_numbers = #tpu.dot_dimension_numbers<[1], [0], [0], [1], [0, 0, 1, 1], [], []>} : vector<8x8xbf16>, vector<8x128xbf16>, vector<8x128xf32> -> vector<8x128xf32>
    %87 = arith.addf %77, %86 : vector<8x128xf32>
    %88 = vector.extract_strided_slice %87 {offsets = [0, 0], sizes = [8, 8], strides = [1, 1]} : vector<8x128xf32> to vector<8x8xf32>
    %89 = vector.extract_strided_slice %87 {offsets = [0, 8], sizes = [8, 1], strides = [1, 1]} : vector<8x128xf32> to vector<8x1xf32>
    %cst_80 = arith.constant 9.99999974E-5 : f32
    %90 = vector.broadcast %cst_80 : f32 to vector<8x1xf32>
    %91 = arith.maximumf %89, %90 : vector<8x1xf32>
    %92 = tpu.reciprocal %91 {approx = true} : vector<8x1xf32> -> vector<8x1xf32>
    %93 = vector.broadcast %92 : vector<8x1xf32> to vector<8x8xf32>
    %94 = arith.mulf %88, %93 : vector<8x8xf32>
    %95 = arith.truncf %94 : vector<8x8xf32> to vector<8x8xbf16>
    %c0_81 = arith.constant 0 : index
    %c2_82 = arith.constant 2 : index
    %c0_83 = arith.constant 0 : index
    %c0_84 = arith.constant 0 : index
    %96 = vector.load %arg4[%c0_81, %c2_82, %c0_83, %c0_84] : memref<1x4x8x32xbf16, #tpu.memory_space<vmem>>, vector<1x1x8x32xbf16>
    %97 = vector.shape_cast %96 : vector<1x1x8x32xbf16> to vector<8x32xbf16>
    %c0_85 = arith.constant 0 : index
    %c2_86 = arith.constant 2 : index
    %c0_87 = arith.constant 0 : index
    %c0_88 = arith.constant 0 : index
    %98 = vector.load %arg5[%c0_85, %c2_86, %c0_87, %c0_88] : memref<1x4x8x128xbf16, #tpu.memory_space<vmem>>, vector<1x1x8x128xbf16>
    %99 = vector.shape_cast %98 : vector<1x1x8x128xbf16> to vector<8x128xbf16>
    %cst_89 = arith.constant dense<0.000000e+00> : vector<32x128xf32>
    %100 = tpu.matmul %97, %99, %cst_89 {dimension_numbers = #tpu.dot_dimension_numbers<[0], [0], [1], [1], [0, 1, 1, 1], [], []>} : vector<8x32xbf16>, vector<8x128xbf16>, vector<32x128xf32> -> vector<32x128xf32>
    %101 = arith.addf %73, %100 : vector<32x128xf32>
    %c2_90 = arith.constant 2 : index
    %c0_91 = arith.constant 0 : index
    %c0_92 = arith.constant 0 : index
    %102 = vector.load %arg7[%c2_90, %c0_91, %c0_92] : memref<4x32x128xf32, #tpu.memory_space<vmem>>, vector<1x32x128xf32>
    %103 = vector.shape_cast %102 : vector<1x32x128xf32> to vector<32x128xf32>
    %104 = vector.shape_cast %101 : vector<32x128xf32> to vector<1x32x128xf32>
    tpu.vector_store %arg7[%c2_90, %c0_91, %c0_92], %104 {strides = array<i32>} : memref<4x32x128xf32, #tpu.memory_space<vmem>>, vector<1x32x128xf32>,
    %c3 = arith.constant 3 : index
    %c0_93 = arith.constant 0 : index
    %c0_94 = arith.constant 0 : index
    %105 = vector.load %arg7[%c3, %c0_93, %c0_94] : memref<4x32x128xf32, #tpu.memory_space<vmem>>, vector<1x32x128xf32>
    %106 = vector.shape_cast %105 : vector<1x32x128xf32> to vector<32x128xf32>
    %107 = arith.truncf %106 : vector<32x128xf32> to vector<32x128xbf16>
    %c0_95 = arith.constant 0 : index
    %c3_96 = arith.constant 3 : index
    %c0_97 = arith.constant 0 : index
    %c0_98 = arith.constant 0 : index
    %108 = vector.load %arg3[%c0_95, %c3_96, %c0_97, %c0_98] : memref<1x4x8x32xbf16, #tpu.memory_space<vmem>>, vector<1x1x8x32xbf16>
    %109 = vector.shape_cast %108 : vector<1x1x8x32xbf16> to vector<8x32xbf16>
    %cst_99 = arith.constant dense<0.000000e+00> : vector<8x128xf32>
    %110 = tpu.matmul %109, %107, %cst_99 {dimension_numbers = #tpu.dot_dimension_numbers<[1], [0], [0], [1], [0, 0, 1, 1], [], []>} : vector<8x32xbf16>, vector<32x128xbf16>, vector<8x128xf32> -> vector<8x128xf32>
    %c0_100 = arith.constant 0 : index
    %c3_101 = arith.constant 3 : index
    %c0_102 = arith.constant 0 : index
    %c0_103 = arith.constant 0 : index
    %111 = vector.load %arg4[%c0_100, %c3_101, %c0_102, %c0_103] : memref<1x4x8x32xbf16, #tpu.memory_space<vmem>>, vector<1x1x8x32xbf16>
    %112 = vector.shape_cast %111 : vector<1x1x8x32xbf16> to vector<8x32xbf16>
    %cst_104 = arith.constant dense<0.000000e+00> : vector<8x8xf32>
    %113 = tpu.matmul %109, %112, %cst_104 {dimension_numbers = #tpu.dot_dimension_numbers<[1], [1], [0], [0], [0, 0, 1, 0], [], []>} : vector<8x32xbf16>, vector<8x32xbf16>, vector<8x8xf32> -> vector<8x8xf32>
    %cst_105 = arith.constant 0.000000e+00 : f32
    %114 = vector.broadcast %cst_105 : f32 to vector<8x8xf32>
    %115 = arith.select %5, %113, %114 : vector<8x8xi1>, vector<8x8xf32>
    %116 = arith.truncf %115 : vector<8x8xf32> to vector<8x8xbf16>
    %c0_106 = arith.constant 0 : index
    %c3_107 = arith.constant 3 : index
    %c0_108 = arith.constant 0 : index
    %c0_109 = arith.constant 0 : index
    %117 = vector.load %arg5[%c0_106, %c3_107, %c0_108, %c0_109] : memref<1x4x8x128xbf16, #tpu.memory_space<vmem>>, vector<1x1x8x128xbf16>
    %118 = vector.shape_cast %117 : vector<1x1x8x128xbf16> to vector<8x128xbf16>
    %cst_110 = arith.constant dense<0.000000e+00> : vector<8x128xf32>
    %119 = tpu.matmul %116, %118, %cst_110 {dimension_numbers = #tpu.dot_dimension_numbers<[1], [0], [0], [1], [0, 0, 1, 1], [], []>} : vector<8x8xbf16>, vector<8x128xbf16>, vector<8x128xf32> -> vector<8x128xf32>
    %120 = arith.addf %110, %119 : vector<8x128xf32>
    %121 = vector.extract_strided_slice %120 {offsets = [0, 0], sizes = [8, 8], strides = [1, 1]} : vector<8x128xf32> to vector<8x8xf32>
    %122 = vector.extract_strided_slice %120 {offsets = [0, 8], sizes = [8, 1], strides = [1, 1]} : vector<8x128xf32> to vector<8x1xf32>
    %cst_111 = arith.constant 9.99999974E-5 : f32
    %123 = vector.broadcast %cst_111 : f32 to vector<8x1xf32>
    %124 = arith.maximumf %122, %123 : vector<8x1xf32>
    %125 = tpu.reciprocal %124 {approx = true} : vector<8x1xf32> -> vector<8x1xf32>
    %126 = vector.broadcast %125 : vector<8x1xf32> to vector<8x8xf32>
    %127 = arith.mulf %121, %126 : vector<8x8xf32>
    %128 = arith.truncf %127 : vector<8x8xf32> to vector<8x8xbf16>
    %c0_112 = arith.constant 0 : index
    %c3_113 = arith.constant 3 : index
    %c0_114 = arith.constant 0 : index
    %c0_115 = arith.constant 0 : index
    %129 = vector.load %arg4[%c0_112, %c3_113, %c0_114, %c0_115] : memref<1x4x8x32xbf16, #tpu.memory_space<vmem>>, vector<1x1x8x32xbf16>
    %130 = vector.shape_cast %129 : vector<1x1x8x32xbf16> to vector<8x32xbf16>
    %c0_116 = arith.constant 0 : index
    %c3_117 = arith.constant 3 : index
    %c0_118 = arith.constant 0 : index
    %c0_119 = arith.constant 0 : index
    %131 = vector.load %arg5[%c0_116, %c3_117, %c0_118, %c0_119] : memref<1x4x8x128xbf16, #tpu.memory_space<vmem>>, vector<1x1x8x128xbf16>
    %132 = vector.shape_cast %131 : vector<1x1x8x128xbf16> to vector<8x128xbf16>
    %cst_120 = arith.constant dense<0.000000e+00> : vector<32x128xf32>
    %133 = tpu.matmul %130, %132, %cst_120 {dimension_numbers = #tpu.dot_dimension_numbers<[0], [0], [1], [1], [0, 1, 1, 1], [], []>} : vector<8x32xbf16>, vector<8x128xbf16>, vector<32x128xf32> -> vector<32x128xf32>
    %134 = arith.addf %106, %133 : vector<32x128xf32>
    %c3_121 = arith.constant 3 : index
    %c0_122 = arith.constant 0 : index
    %c0_123 = arith.constant 0 : index
    %135 = vector.load %arg7[%c3_121, %c0_122, %c0_123] : memref<4x32x128xf32, #tpu.memory_space<vmem>>, vector<1x32x128xf32>
    %136 = vector.shape_cast %135 : vector<1x32x128xf32> to vector<32x128xf32>
    %137 = vector.shape_cast %134 : vector<32x128xf32> to vector<1x32x128xf32>
    tpu.vector_store %arg7[%c3_121, %c0_122, %c0_123], %137 {strides = array<i32>} : memref<4x32x128xf32, #tpu.memory_space<vmem>>, vector<1x32x128xf32>,
    %138 = tpu.concatenate %29, %62, %95, %128 in 1 : vector<8x8xbf16>, vector<8x8xbf16>, vector<8x8xbf16>, vector<8x8xbf16> -> vector<8x32xbf16>
    %c0_124 = arith.constant 0 : index
    %c0_125 = arith.constant 0 : index
    %c0_126 = arith.constant 0 : index
    %139 = vector.load %arg6[%c0_124, %c0_125, %c0_126] : memref<1x8x32xbf16, #tpu.memory_space<vmem>>, vector<1x8x32xbf16>
    %140 = vector.shape_cast %139 : vector<1x8x32xbf16> to vector<8x32xbf16>
    %141 = vector.shape_cast %138 : vector<8x32xbf16> to vector<1x8x32xbf16>
    tpu.vector_store %arg6[%c0_124, %c0_125, %c0_126], %141 {strides = array<i32>} : memref<1x8x32xbf16, #tpu.memory_space<vmem>>, vector<1x8x32xbf16>,
    return
  }
  func.func @transform_0(%arg0: i32, %arg1: i32, %arg2: i32) -> (i32, i32, i32, i32) {
    %c0_i32 = arith.constant 0 : i32
    %c0_i32_0 = arith.constant 0 : i32
    return %arg0, %arg1, %arg2, %c0_i32 : i32, i32, i32, i32
  }
  func.func @transform_1(%arg0: i32, %arg1: i32, %arg2: i32) -> (i32, i32, i32, i32) {
    %c0_i32 = arith.constant 0 : i32
    %c0_i32_0 = arith.constant 0 : i32
    return %arg0, %arg1, %arg2, %c0_i32 : i32, i32, i32, i32
  }
  func.func @transform_2(%arg0: i32, %arg1: i32, %arg2: i32) -> (i32, i32, i32, i32) {
    %c0_i32 = arith.constant 0 : i32
    %c0_i32_0 = arith.constant 0 : i32
    return %arg0, %arg1, %arg2, %c0_i32 : i32, i32, i32, i32
  }
  func.func @transform_3(%arg0: i32, %arg1: i32, %arg2: i32) -> (i32, i32, i32) {
    %c0_i32 = arith.constant 0 : i32
    return %arg0, %arg2, %arg1 : i32, i32, i32
  }
}

</mosaic_0001>

<llo_original>
// kernel: causal_attention_forward.1
$region0: #{causal_attention_forward.1}
  #allocation0 [shape = 'u32[]', space=smem, size = 0x4, offset = 0x4, fixed_abs, tag = 'smem constant byte address 0x4 - core index']
  #allocation1 [shape = 'u32[72,128]{1,0:T(1,128)}', space=vmem, size = 0x9000, scoped, tag = 'internal scratch']
  #allocation2 [shape = 'f32[4,32,128]{2,1,0:T(8,128)}', space=vmem, size = 0x10000, scoped, tag = 'scratch operand']
  %s0 = inlined_call_operand.vmem [shape: bf16[2,4,8,32], index: 0, kind: input, shape index: {}]
  %s1 = inlined_call_operand.vmem [shape: bf16[2,4,8,32], index: 1, kind: input, shape index: {}]
  %s2 = inlined_call_operand.vmem [shape: bf16[2,4,8,128], index: 2, kind: input, shape index: {}]
  %s3 = inlined_call_operand.vmem [shape: bf16[2,8,32], index: 3, kind: output, shape index: {}]
  %s4 = sld [smem:[#allocation0]]
  $region49: #{causal_attention_forward.1} parent=0
    _
  %s6 = ssub.s32 1, %s4
  %s7 = scalar_select 0, %s6, %s4
  loop: start=0, step=1, limit=4
  $region2: #{causal_attention_forward.1} parent=0 // loop_pre_header
    _
  $region3: #{causal_attention_forward.1} parent=0 // loop_header
    %s9 = sphi 0, %s13
    %p10 = scmp.ge.s32.totalorder %s9, 4
    %s16 = sphi 0, %s35
    %s17 = sphi 0, %s31
    %s18 = sphi 0, %s27
    %s19 = sphi 0, %s16
    %s20 = sphi 0, %s17
    %s21 = sphi 0, %s18
    %s22 = sphi 0, %s19
    %s23 = sphi 0, %s20
    %s24 = sphi 0, %s21
    %s42 = sphi 0, %s44
    %s45 = sphi 0, %s42
    %s46 = sphi 0, %s45
    %s62 = sphi 0, %s46
    %s72 = sphi 0, %s74
    %s75 = sphi 0, %s72
    %s76 = sphi 0, %s75
    %s92 = sphi 0, %s76
    %s102 = sphi 0, %s104
    %s105 = sphi 0, %s102
    %s106 = sphi 0, %s105
    %s122 = sphi 0, %s106
    %s132 = sphi 0, %s134
    %s135 = sphi 0, %s132
    %s136 = sphi 0, %s135
    %s152 = sphi 0, %s136
  $region4: #{causal_attention_forward.1} parent=0 // loop_header_branch
    %12 = sbr.rel (%p10) target = $region8
  $region5: #{causal_attention_forward.1} parent=0 // loop_body
    %s14 = ssub.s32 %s9, 1
    %s15 = ssub.s32 %s9, 2
    %s25 = sadd.s32 1, %s18
    %p26 = scmp.ge.s32.totalorder %s25, 1
    %s27 = scalar_select %p26, 0, %s25
    %s28 = sadd.s32 1, %s17
    %s29 = scalar_select %p26, %s28, %s17
    %p30 = scmp.ge.s32.totalorder %s29, 1
    %s31 = scalar_select %p30, 0, %s29
    %s32 = sadd.s32 1, %s16
    %s33 = scalar_select %p30, %s32, %s16
    %p34 = scmp.ge.s32.totalorder %s33, 2
    %s35 = scalar_select %p34, 0, %s33
    %s36 = ssub.s32 %s16, %s35
    %s37 = ssub.s32 %s17, %s31
    %s38 = sor.u32 %s36, %s37
    %s39 = ssub.s32 %s18, %s27
    %s40 = sor.u32 %s38, %s39
    %p41 = scmp.eq.s32.totalorder %s40, 0
    %s43 = sadd.s32 %s42, 1
    %s44 = scalar_select %p41, %s42, %s43
    %p47 = pneg %p41
    %p48 = scmp.eq.s32.totalorder %s9, 1
    %p49 = por %p47, %p48
    %p50 = scmp.ne.s32.totalorder %s42, %s45
    %p51 = scmp.eq.s32.totalorder %s9, 0
    %p52 = por %p50, %p51
    %p53 = scmp.ne.s32.totalorder %s42, %s45
    %p54 = scmp.eq.s32.totalorder %s14, 1
    %p55 = por %p53, %p54
    %p56 = scmp.ne.s32.totalorder %s45, %s46
    %p57 = scmp.eq.s32.totalorder %s14, 0
    %p58 = por %p56, %p57
    %p59 = scmp.ne.s32.totalorder %s45, %s46
    %p60 = scmp.eq.s32.totalorder %s15, 1
    %p61 = por %p59, %p60
    %p63 = scmp.ne.s32.totalorder %s46, %s62
    %p64 = scmp.eq.s32.totalorder %s15, 0
    %p65 = por %p63, %p64
    %s66 = ssub.s32 %s16, %s35
    %s67 = ssub.s32 %s17, %s31
    %s68 = sor.u32 %s66, %s67
    %s69 = ssub.s32 %s18, %s27
    %s70 = sor.u32 %s68, %s69
    %p71 = scmp.eq.s32.totalorder %s70, 0
    %s73 = sadd.s32 %s72, 1
    %s74 = scalar_select %p71, %s72, %s73
    %p77 = pneg %p71
    %p78 = scmp.eq.s32.totalorder %s9, 1
    %p79 = por %p77, %p78
    %p80 = scmp.ne.s32.totalorder %s72, %s75
    %p81 = scmp.eq.s32.totalorder %s9, 0
    %p82 = por %p80, %p81
    %p83 = scmp.ne.s32.totalorder %s72, %s75
    %p84 = scmp.eq.s32.totalorder %s14, 1
    %p85 = por %p83, %p84
    %p86 = scmp.ne.s32.totalorder %s75, %s76
    %p87 = scmp.eq.s32.totalorder %s14, 0
    %p88 = por %p86, %p87
    %p89 = scmp.ne.s32.totalorder %s75, %s76
    %p90 = scmp.eq.s32.totalorder %s15, 1
    %p91 = por %p89, %p90
    %p93 = scmp.ne.s32.totalorder %s76, %s92
    %p94 = scmp.eq.s32.totalorder %s15, 0
    %p95 = por %p93, %p94
    %s96 = ssub.s32 %s16, %s35
    %s97 = ssub.s32 %s17, %s31
    %s98 = sor.u32 %s96, %s97
    %s99 = ssub.s32 %s18, %s27
    %s100 = sor.u32 %s98, %s99
    %p101 = scmp.eq.s32.totalorder %s100, 0
    %s103 = sadd.s32 %s102, 1
    %s104 = scalar_select %p101, %s102, %s103
    %p107 = pneg %p101
    %p108 = scmp.eq.s32.totalorder %s9, 1
    %p109 = por %p107, %p108
    %p110 = scmp.ne.s32.totalorder %s102, %s105
    %p111 = scmp.eq.s32.totalorder %s9, 0
    %p112 = por %p110, %p111
    %p113 = scmp.ne.s32.totalorder %s102, %s105
    %p114 = scmp.eq.s32.totalorder %s14, 1
    %p115 = por %p113, %p114
    %p116 = scmp.ne.s32.totalorder %s105, %s106
    %p117 = scmp.eq.s32.totalorder %s14, 0
    %p118 = por %p116, %p117
    %p119 = scmp.ne.s32.totalorder %s105, %s106
    %p120 = scmp.eq.s32.totalorder %s15, 1
    %p121 = por %p119, %p120
    %p123 = scmp.ne.s32.totalorder %s106, %s122
    %p124 = scmp.eq.s32.totalorder %s15, 0
    %p125 = por %p123, %p124
    %s126 = ssub.s32 %s16, %s35
    %s127 = ssub.s32 %s18, %s27
    %s128 = sor.u32 %s126, %s127
    %s129 = ssub.s32 %s17, %s31
    %s130 = sor.u32 %s128, %s129
    %p131 = scmp.eq.s32.totalorder %s130, 0
    %s133 = sadd.s32 %s132, 1
    %s134 = scalar_select %p131, %s132, %s133
    %p137 = pneg %p131
    %p138 = scmp.eq.s32.totalorder %s9, 1
    %p139 = por %p137, %p138
    %p140 = scmp.ne.s32.totalorder %s132, %s135
    %p141 = scmp.eq.s32.totalorder %s9, 0
    %p142 = por %p140, %p141
    %p143 = scmp.ne.s32.totalorder %s132, %s135
    %p144 = scmp.eq.s32.totalorder %s14, 1
    %p145 = por %p143, %p144
    %p146 = scmp.ne.s32.totalorder %s135, %s136
    %p147 = scmp.eq.s32.totalorder %s14, 0
    %p148 = por %p146, %p147
    %p149 = scmp.ne.s32.totalorder %s135, %s136
    %p150 = scmp.eq.s32.totalorder %s15, 1
    %p151 = por %p149, %p150
    %p153 = scmp.ne.s32.totalorder %s136, %s152
    %p154 = scmp.eq.s32.totalorder %s15, 0
    %p155 = por %p153, %p154
    %p156 = scmp.le.s32.totalorder 1, %s9
    %p157 = scmp.lt.s32.totalorder %s9, 3
    %p158 = pnand %p156, %p157
    %p159 = pneg %p158
    // Predicated region
    $region9: #{causal_attention_forward.1} parent=5 // pred_check
      _
    $region10: #{causal_attention_forward.1} parent=5 // pred_check_branch
      %161 = sbr.rel (%p158) target = $region12
    $region11: #{causal_attention_forward.1} parent=5 // pred_region
      %s162 = ssub.s32 %s9, 1
    $region12: #{causal_attention_forward.1} parent=5 // pred_fallthru
      _
    %p163 = scmp.lt.s32.totalorder %s9, 2
    // Predicated region
    $region13: #{causal_attention_forward.1} parent=5 // pred_check
      %p164 = pneg %p163
    $region14: #{causal_attention_forward.1} parent=5 // pred_check_branch
      %166 = sbr.rel (%p164) target = $region16
    $region15: #{causal_attention_forward.1} parent=5 // pred_region
      // Predicated region
      $region17: #{causal_attention_forward.1} parent=15 // pred_check
        %p167 = pneg %p52
      $region18: #{causal_attention_forward.1} parent=15 // pred_check_branch
        %169 = sbr.rel (%p167) target = $region20
      $region19: #{causal_attention_forward.1} parent=15 // pred_region
        %s170 = smul.u32 4, %s17
        %p171 = scmp.lt.s32.totalorder %s16, 1
        %s172 = scalar_select %p171, %s16, 1
        %p173 = scmp.lt.s32.totalorder %s170, 3
        %s174 = scalar_select %p173, %s170, 3
        %p175 = scmp.lt.s32.totalorder %s18, 0
        %s176 = scalar_select %p175, %s18, 0
        %s177 = sadd.s32 %s176, %s174
        %s178 = smul.addr %s172, 4
        %s179 = sadd.s32 %s177, %s178
        %s180 = smul.addr %s179, 4
        %s181 = scalar_lea.vmem %s0, %s180
        %s182 = smul.u32 4, %s17
      $region20: #{causal_attention_forward.1} parent=15 // pred_fallthru
        _
      // Predicated region
      $region21: #{causal_attention_forward.1} parent=15 // pred_check
        %p183 = pneg %p82
      $region22: #{causal_attention_forward.1} parent=15 // pred_check_branch
        %185 = sbr.rel (%p183) target = $region24
      $region23: #{causal_attention_forward.1} parent=15 // pred_region
        %s186 = smul.u32 4, %s17
        %p187 = scmp.lt.s32.totalorder %s16, 1
        %s188 = scalar_select %p187, %s16, 1
        %p189 = scmp.lt.s32.totalorder %s186, 3
        %s190 = scalar_select %p189, %s186, 3
        %p191 = scmp.lt.s32.totalorder %s18, 0
        %s192 = scalar_select %p191, %s18, 0
        %s193 = sadd.s32 %s192, %s190
        %s194 = smul.addr %s188, 4
        %s195 = sadd.s32 %s193, %s194
        %s196 = smul.addr %s195, 4
        %s197 = scalar_lea.vmem %s1, %s196
        %s198 = smul.u32 4, %s17
      $region24: #{causal_attention_forward.1} parent=15 // pred_fallthru
        _
      // Predicated region
      $region25: #{causal_attention_forward.1} parent=15 // pred_check
        %p199 = pneg %p112
      $region26: #{causal_attention_forward.1} parent=15 // pred_check_branch
        %201 = sbr.rel (%p199) target = $region28
      $region27: #{causal_attention_forward.1} parent=15 // pred_region
        %s202 = smul.u32 4, %s17
        %p203 = scmp.lt.s32.totalorder %s16, 1
        %s204 = scalar_select %p203, %s16, 1
        %p205 = scmp.lt.s32.totalorder %s202, 3
        %s206 = scalar_select %p205, %s202, 3
        %p207 = scmp.lt.s32.totalorder %s18, 0
        %s208 = scalar_select %p207, %s18, 0
        %s209 = sadd.s32 %s208, %s206
        %s210 = smul.addr %s204, 4
        %s211 = sadd.s32 %s209, %s210
        %s212 = smul.addr %s211, 4
        %s213 = scalar_lea.vmem %s2, %s212
        %s214 = smul.u32 4, %s17
      $region28: #{causal_attention_forward.1} parent=15 // pred_fallthru
        _
    $region16: #{causal_attention_forward.1} parent=5 // pred_fallthru
      _
    %p215 = scmp.le.s32.totalorder 1, %s9
    %p216 = scmp.lt.s32.totalorder %s9, 3
    %p217 = pnand %p215, %p216
    %p218 = pneg %p217
    // Predicated region
    $region29: #{causal_attention_forward.1} parent=5 // pred_check
      _
    $region30: #{causal_attention_forward.1} parent=5 // pred_check_branch
      %220 = sbr.rel (%p217) target = $region32
    $region31: #{causal_attention_forward.1} parent=5 // pred_region
      %s221 = ssub.s32 %s9, 1
      %s222 = smul.u32 4, %s20
      %p223 = scmp.lt.s32.totalorder %s19, 1
      %s224 = scalar_select %p223, %s19, 1
      %p225 = scmp.lt.s32.totalorder %s222, 3
      %s226 = scalar_select %p225, %s222, 3
      %p227 = scmp.lt.s32.totalorder %s21, 0
      %s228 = scalar_select %p227, %s21, 0
      %s229 = sadd.s32 %s228, %s226
      %s230 = smul.addr %s224, 4
      %s231 = sadd.s32 %s229, %s230
      %s232 = smul.addr %s231, 4
      %s233 = scalar_lea.vmem %s0, %s232
      %p234 = pneg %p58
      %p235 = pneg %p55
      %s236 = smul.u32 4, %s20
      %p237 = scmp.lt.s32.totalorder %s19, 1
      %s238 = scalar_select %p237, %s19, 1
      %p239 = scmp.lt.s32.totalorder %s236, 3
      %s240 = scalar_select %p239, %s236, 3
      %p241 = scmp.lt.s32.totalorder %s21, 0
      %s242 = scalar_select %p241, %s21, 0
      %s243 = sadd.s32 %s242, %s240
      %s244 = smul.addr %s238, 4
      %s245 = sadd.s32 %s243, %s244
      %s246 = smul.addr %s245, 4
      %s247 = scalar_lea.vmem %s1, %s246
      %p248 = pneg %p88
      %p249 = pneg %p85
      %s250 = smul.u32 4, %s20
      %p251 = scmp.lt.s32.totalorder %s19, 1
      %s252 = scalar_select %p251, %s19, 1
      %p253 = scmp.lt.s32.totalorder %s250, 3
      %s254 = scalar_select %p253, %s250, 3
      %p255 = scmp.lt.s32.totalorder %s21, 0
      %s256 = scalar_select %p255, %s21, 0
      %s257 = sadd.s32 %s256, %s254
      %s258 = smul.addr %s252, 4
      %s259 = sadd.s32 %s257, %s258
      %s260 = smul.addr %s259, 4
      %s261 = scalar_lea.vmem %s2, %s260
      %p262 = pneg %p118
      %p263 = pneg %p115
      %p264 = pneg %p148
      %p265 = pneg %p145
      %p266 = scmp.lt.s32.totalorder %s19, 1
      %s267 = scalar_select %p266, %s19, 1
      %p268 = scmp.lt.s32.totalorder %s21, 0
      %s269 = scalar_select %p268, %s21, 0
      %p270 = scmp.lt.s32.totalorder %s20, 0
      %s271 = scalar_select %p270, %s20, 0
      %s272 = sadd.s32 %s271, %s269
      %s273 = sadd.s32 %s272, %s267
      %s274 = smul.addr %s273, 4
      %s275 = scalar_lea.vmem %s3, %s274
      %s276 = smul.u32 4, %s20
      %p277 = scmp.lt.s32.totalorder %s19, 1
      %s278 = scalar_select %p277, %s19, 1
      %p279 = scmp.lt.s32.totalorder %s276, 3
      %s280 = scalar_select %p279, %s276, 3
      %p281 = scmp.lt.s32.totalorder %s21, 0
      %s282 = scalar_select %p281, %s21, 0
      %s283 = sadd.s32 %s282, %s280
      %s284 = smul.addr %s278, 4
      %s285 = sadd.s32 %s283, %s284
      %s286 = smul.addr %s285, 4
      %s287 = scalar_lea.vmem %s0, %s286
      %s288 = smul.u32 4, %s20
      %s289 = smul.u32 4, %s20
      %p290 = scmp.lt.s32.totalorder %s19, 1
      %s291 = scalar_select %p290, %s19, 1
      %p292 = scmp.lt.s32.totalorder %s289, 3
      %s293 = scalar_select %p292, %s289, 3
      %p294 = scmp.lt.s32.totalorder %s21, 0
      %s295 = scalar_select %p294, %s21, 0
      %s296 = sadd.s32 %s295, %s293
      %s297 = smul.addr %s291, 4
      %s298 = sadd.s32 %s296, %s297
      %s299 = smul.addr %s298, 4
      %s300 = scalar_lea.vmem %s1, %s299
      %s301 = smul.u32 4, %s20
      %s302 = smul.u32 4, %s20
      %p303 = scmp.lt.s32.totalorder %s19, 1
      %s304 = scalar_select %p303, %s19, 1
      %p305 = scmp.lt.s32.totalorder %s302, 3
      %s306 = scalar_select %p305, %s302, 3
      %p307 = scmp.lt.s32.totalorder %s21, 0
      %s308 = scalar_select %p307, %s21, 0
      %s309 = sadd.s32 %s308, %s306
      %s310 = smul.addr %s304, 4
      %s311 = sadd.s32 %s309, %s310
      %s312 = smul.addr %s311, 4
      %s313 = scalar_lea.vmem %s2, %s312
      %s314 = smul.u32 4, %s20
      %p315 = scmp.lt.s32.totalorder %s19, 1
      %s316 = scalar_select %p315, %s19, 1
      %p317 = scmp.lt.s32.totalorder %s21, 0
      %s318 = scalar_select %p317, %s21, 0
      %p319 = scmp.lt.s32.totalorder %s20, 0
      %s320 = scalar_select %p319, %s20, 0
      %s321 = sadd.s32 %s320, %s318
      %s322 = sadd.s32 %s321, %s316
      %s323 = smul.addr %s322, 4
      %s324 = scalar_lea.vmem %s3, %s323
      %p326 = scmp.eq.s32.totalorder %s21, 0
      // Predicated region
      $region33: #{causal_attention_forward.1} parent=31 // pred_check
        %p327 = pneg %p326
      $region34: #{causal_attention_forward.1} parent=31 // pred_check_branch
        %329 = sbr.rel (%p327) target = $region36
      $region35: #{causal_attention_forward.1} parent=31 // pred_region
        %330 = vst [vmem:[#allocation2] sm:$0xff] 0.0
        %331 = vst [vmem:[#allocation2 + $0x8] sm:$0xff] 0.0
        %332 = vst [vmem:[#allocation2 + $0x10] sm:$0xff] 0.0
        %333 = vst [vmem:[#allocation2 + $0x18] sm:$0xff] 0.0
        %334 = vst [vmem:[#allocation2 + $0x20] sm:$0xff] 0.0
        %335 = vst [vmem:[#allocation2 + $0x28] sm:$0xff] 0.0
        %336 = vst [vmem:[#allocation2 + $0x30] sm:$0xff] 0.0
        %337 = vst [vmem:[#allocation2 + $0x38] sm:$0xff] 0.0
        %338 = vst [vmem:[#allocation2 + $0x40] sm:$0xff] 0.0
        %339 = vst [vmem:[#allocation2 + $0x48] sm:$0xff] 0.0
        %340 = vst [vmem:[#allocation2 + $0x50] sm:$0xff] 0.0
        %341 = vst [vmem:[#allocation2 + $0x58] sm:$0xff] 0.0
        %342 = vst [vmem:[#allocation2 + $0x60] sm:$0xff] 0.0
        %343 = vst [vmem:[#allocation2 + $0x68] sm:$0xff] 0.0
        %344 = vst [vmem:[#allocation2 + $0x70] sm:$0xff] 0.0
        %345 = vst [vmem:[#allocation2 + $0x78] sm:$0xff] 0.0
      $region36: #{causal_attention_forward.1} parent=31 // pred_fallthru
        _
      %v346 = vlaneseq
      %v347 = vshrl.u32 %v346, 7
      %v348 = vlaneseq
      %v349 = vand.u32 %v348, 127
      %vm350 = vcmp.le.s32.totalorder %v349, %v347
      %v351 = vld [vmem:[#allocation2] sm:$0xff]
      %v352 = vld [vmem:[#allocation2 + $0x8] sm:$0xff]
      %v353 = vld [vmem:[#allocation2 + $0x10] sm:$0xff]
      %v354 = vld [vmem:[#allocation2 + $0x18] sm:$0xff]
      %v355 = vpack.c.bf16 %v352, %v351
      %v356 = vpack.c.bf16 %v354, %v353
      %v357 = vld [vmem:[%s287] sm:$0xf]
      %v358 = vld [vmem:[%s300] sm:$0xf]
      %vm359 = vcmask 261120
      %v361 = vsel %vm359, %v357, 0
      %v364 = vsel %vm359, %v358, 0
      %366 = vmatpush.bf16.xpose.msra.mxu0 0
      %367 = vmatpush.bf16.xpose.msra.mxu0 0
      %368 = vmatpush.bf16.xpose.msra.mxu0 0
      %369 = vmatpush.bf16.xpose.msra.mxu0 0
      %370 = vmatpush.bf16.xpose.msra.mxu0 0
      %371 = vmatpush.bf16.xpose.msra.mxu0 0
      %372 = vmatpush.bf16.xpose.msra.mxu0 0
      %373 = vmatpush.bf16.xpose.msra.mxu0 %v364
      %374 = vmatmul.bf16.gmra.mxu0 %v361
      %v375 = vpop.f32.mrf.mxu0
      %v376 = vadd.f32 0.0, %v375
      %v377 = vpop.f32.mrf.mxu0
      %378 = vdwg.mxu0
      %v379 = vsel %vm350, %v376, 0.0
      %v380 = vpack.c.bf16 %v379, %v379
      %v381 = vld [vmem:[%s313] sm:$0xf]
      %vm382 = vcmask 64512
      %v384 = vsel %vm382, %v380, 0
      %vm386 = vcmask 1043456
      %v388 = vsel %vm386, %v381, 0
      %390 = vmatpush.bf16.msra.mxu0 0
      %391 = vmatpush.bf16.msra.mxu0 0
      %392 = vmatpush.bf16.msra.mxu0 0
      %393 = vmatpush.bf16.msra.mxu0 0
      %394 = vmatpush.bf16.msra.mxu0 0
      %395 = vmatpush.bf16.msra.mxu0 0
      %396 = vmatpush.bf16.msra.mxu0 0
      %397 = vmatpush.bf16.msra.mxu0 %v388
      %398 = vmatmul.bf16.gmra.mxu0 %v384
      %v399 = vpop.f32.mrf.mxu0
      %v400 = vadd.f32 0.0, %v399
      %v401 = vpop.f32.mrf.mxu0
      %402 = vdwg.mxu0
      %403 = vmatpush.bf16.msra.mxu0 0
      %404 = vmatpush.bf16.msra.mxu0 0
      %405 = vmatpush.bf16.msra.mxu0 0
      %406 = vmatpush.bf16.msra.mxu0 0
      %407 = vmatpush.bf16.msra.mxu0 0
      %408 = vmatpush.bf16.msra.mxu0 0
      %409 = vmatpush.bf16.msra.mxu0 %v356
      %410 = vmatpush.bf16.msra.mxu0 %v355
      %411 = vmatmul.bf16.gmra.mxu0 %v361
      %v412 = vpop.f32.mrf.mxu0
      %v413 = vadd.f32 %v400, %v412
      %v414 = vpop.f32.mrf.mxu0
      %415 = vdwg.mxu0
      %v416 = vmax.f32 %v413, 0.0001
      %v417 = vrcp.pop %v416
      %419 = vset.pattern.permute.xlu0 8
      %420 = vperm.xlu0 %419, %v417
      %v421 = vpop.permute.xlu0 %420
      %v423 = vmul.f32 %v413, %v421
      %v424 = vpack.c.bf16 %v423, %v423
      %425 = vxpose.xlu0.c.b16.start [1/8] %v358, 128
      %426 = vxpose.xlu0.c.b16.cont [2/8] 0, 128
      %427 = vxpose.xlu0.c.b16.cont [3/8] 0, 128
      %428 = vxpose.xlu0.c.b16.cont [4/8] 0, 128
      %429 = vxpose.xlu0.c.b16.cont [5/8] 0, 128
      %430 = vxpose.xlu0.c.b16.cont [6/8] 0, 128
      %431 = vxpose.xlu0.c.b16.cont [7/8] 0, 128
      %432 = vxpose.xlu0.c.b16.end [8/8] 0, 128
      %v433 = vpop.trf.xlu0
      %v434 = vpop.trf.xlu0
      %v435 = vpop.trf.xlu0
      %v436 = vpop.trf.xlu0
      %v437 = vpop.trf.xlu0
      %v438 = vpop.trf.xlu0
      %v439 = vpop.trf.xlu0
      %v440 = vpop.trf.xlu0
      %v442 = vsel %vm382, %v433, 0
      %v445 = vsel %vm382, %v434, 0
      %447 = vmatpush.bf16.msra.mxu0 0
      %448 = vmatpush.bf16.msra.mxu0 0
      %449 = vmatpush.bf16.msra.mxu0 0
      %450 = vmatpush.bf16.msra.mxu0 0
      %451 = vmatpush.bf16.msra.mxu0 0
      %452 = vmatpush.bf16.msra.mxu0 0
      %453 = vmatpush.bf16.msra.mxu0 0
      %454 = vmatpush.bf16.msra.mxu0 %v388
      %455 = vmatmul.bf16.gmra.mxu0 %v442
      %v456 = vpop.f32.mrf.mxu0
      %v457 = vadd.f32 0.0, %v456
      %v458 = vpop.f32.mrf.mxu0
      %v459 = vadd.f32 0.0, %v458
      %460 = vmatmul.bf16.gmra.mxu0 %v445
      %v461 = vpop.f32.mrf.mxu0
      %v462 = vadd.f32 0.0, %v461
      %v463 = vpop.f32.mrf.mxu0
      %v464 = vadd.f32 0.0, %v463
      %465 = vdwg.mxu0
      %v466 = vadd.f32 %v351, %v457
      %v467 = vadd.f32 %v352, %v459
      %v468 = vadd.f32 %v353, %v462
      %v469 = vadd.f32 %v354, %v464
      %470 = vst [vmem:[#allocation2] sm:$0xff] %v466
      %471 = vst [vmem:[#allocation2 + $0x8] sm:$0xff] %v467
      %472 = vst [vmem:[#allocation2 + $0x10] sm:$0xff] %v468
      %473 = vst [vmem:[#allocation2 + $0x18] sm:$0xff] %v469
      %s474 = scalar_lea.vmem [#allocation2], 32
      %v475 = vld [vmem:[%s474] sm:$0xff]
      %v476 = vld [vmem:[%s474 + $0x8] sm:$0xff]
      %v477 = vld [vmem:[%s474 + $0x10] sm:$0xff]
      %v478 = vld [vmem:[%s474 + $0x18] sm:$0xff]
      %v479 = vpack.c.bf16 %v476, %v475
      %v480 = vpack.c.bf16 %v478, %v477
      %s481 = scalar_lea.vmem %s287, 4
      %v482 = vld [vmem:[%s481] sm:$0xf]
      %s483 = scalar_lea.vmem %s300, 4
      %v484 = vld [vmem:[%s483] sm:$0xf]
      %v486 = vsel %vm359, %v482, 0
      %v489 = vsel %vm359, %v484, 0
      %491 = vmatpush.bf16.xpose.msra.mxu0 0
      %492 = vmatpush.bf16.xpose.msra.mxu0 0
      %493 = vmatpush.bf16.xpose.msra.mxu0 0
      %494 = vmatpush.bf16.xpose.msra.mxu0 0
      %495 = vmatpush.bf16.xpose.msra.mxu0 0
      %496 = vmatpush.bf16.xpose.msra.mxu0 0
      %497 = vmatpush.bf16.xpose.msra.mxu0 0
      %498 = vmatpush.bf16.xpose.msra.mxu0 %v489
      %499 = vmatmul.bf16.gmra.mxu0 %v486
      %v500 = vpop.f32.mrf.mxu0
      %v501 = vadd.f32 0.0, %v500
      %v502 = vpop.f32.mrf.mxu0
      %503 = vdwg.mxu0
      %v504 = vsel %vm350, %v501, 0.0
      %v505 = vpack.c.bf16 %v504, %v504
      %s506 = scalar_lea.vmem %s313, 4
      %v507 = vld [vmem:[%s506] sm:$0xf]
      %v509 = vsel %vm382, %v505, 0
      %v512 = vsel %vm386, %v507, 0
      %514 = vmatpush.bf16.msra.mxu0 0
      %515 = vmatpush.bf16.msra.mxu0 0
      %516 = vmatpush.bf16.msra.mxu0 0
      %517 = vmatpush.bf16.msra.mxu0 0
      %518 = vmatpush.bf16.msra.mxu0 0
      %519 = vmatpush.bf16.msra.mxu0 0
      %520 = vmatpush.bf16.msra.mxu0 0
      %521 = vmatpush.bf16.msra.mxu0 %v512
      %522 = vmatmul.bf16.gmra.mxu0 %v509
      %v523 = vpop.f32.mrf.mxu0
      %v524 = vadd.f32 0.0, %v523
      %v525 = vpop.f32.mrf.mxu0
      %526 = vdwg.mxu0
      %527 = vmatpush.bf16.msra.mxu0 0
      %528 = vmatpush.bf16.msra.mxu0 0
      %529 = vmatpush.bf16.msra.mxu0 0
      %530 = vmatpush.bf16.msra.mxu0 0
      %531 = vmatpush.bf16.msra.mxu0 0
      %532 = vmatpush.bf16.msra.mxu0 0
      %533 = vmatpush.bf16.msra.mxu0 %v480
      %534 = vmatpush.bf16.msra.mxu0 %v479
      %535 = vmatmul.bf16.gmra.mxu0 %v486
      %v536 = vpop.f32.mrf.mxu0
      %v537 = vadd.f32 %v524, %v536
      %v538 = vpop.f32.mrf.mxu0
      %539 = vdwg.mxu0
      %v540 = vmax.f32 %v537, 0.0001
      %v541 = vrcp.pop %v540
      %543 = vset.pattern.permute.xlu0 8
      %544 = vperm.xlu0 %543, %v541
      %v545 = vpop.permute.xlu0 %544
      %v547 = vmul.f32 %v537, %v545
      %v548 = vpack.c.bf16 %v547, %v547
      %549 = vxpose.xlu0.c.b16.start [1/8] %v484, 128
      %550 = vxpose.xlu0.c.b16.cont [2/8] 0, 128
      %551 = vxpose.xlu0.c.b16.cont [3/8] 0, 128
      %552 = vxpose.xlu0.c.b16.cont [4/8] 0, 128
      %553 = vxpose.xlu0.c.b16.cont [5/8] 0, 128
      %554 = vxpose.xlu0.c.b16.cont [6/8] 0, 128
      %555 = vxpose.xlu0.c.b16.cont [7/8] 0, 128
      %556 = vxpose.xlu0.c.b16.end [8/8] 0, 128
      %v557 = vpop.trf.xlu0
      %v558 = vpop.trf.xlu0
      %v559 = vpop.trf.xlu0
      %v560 = vpop.trf.xlu0
      %v561 = vpop.trf.xlu0
      %v562 = vpop.trf.xlu0
      %v563 = vpop.trf.xlu0
      %v564 = vpop.trf.xlu0
      %v566 = vsel %vm382, %v557, 0
      %v569 = vsel %vm382, %v558, 0
      %571 = vmatpush.bf16.msra.mxu0 0
      %572 = vmatpush.bf16.msra.mxu0 0
      %573 = vmatpush.bf16.msra.mxu0 0
      %574 = vmatpush.bf16.msra.mxu0 0
      %575 = vmatpush.bf16.msra.mxu0 0
      %576 = vmatpush.bf16.msra.mxu0 0
      %577 = vmatpush.bf16.msra.mxu0 0
      %578 = vmatpush.bf16.msra.mxu0 %v512
      %579 = vmatmul.bf16.gmra.mxu0 %v566
      %v580 = vpop.f32.mrf.mxu0
      %v581 = vadd.f32 0.0, %v580
      %v582 = vpop.f32.mrf.mxu0
      %v583 = vadd.f32 0.0, %v582
      %584 = vmatmul.bf16.gmra.mxu0 %v569
      %v585 = vpop.f32.mrf.mxu0
      %v586 = vadd.f32 0.0, %v585
      %v587 = vpop.f32.mrf.mxu0
      %v588 = vadd.f32 0.0, %v587
      %589 = vdwg.mxu0
      %v590 = vadd.f32 %v475, %v581
      %v591 = vadd.f32 %v476, %v583
      %v592 = vadd.f32 %v477, %v586
      %v593 = vadd.f32 %v478, %v588
      %594 = vst [vmem:[%s474] sm:$0xff] %v590
      %595 = vst [vmem:[%s474 + $0x8] sm:$0xff] %v591
      %596 = vst [vmem:[%s474 + $0x10] sm:$0xff] %v592
      %597 = vst [vmem:[%s474 + $0x18] sm:$0xff] %v593
      %s598 = scalar_lea.vmem [#allocation2], 64
      %v599 = vld [vmem:[%s598] sm:$0xff]
      %v600 = vld [vmem:[%s598 + $0x8] sm:$0xff]
      %v601 = vld [vmem:[%s598 + $0x10] sm:$0xff]
      %v602 = vld [vmem:[%s598 + $0x18] sm:$0xff]
      %v603 = vpack.c.bf16 %v600, %v599
      %v604 = vpack.c.bf16 %v602, %v601
      %s605 = scalar_lea.vmem %s287, 8
      %v606 = vld [vmem:[%s605] sm:$0xf]
      %s607 = scalar_lea.vmem %s300, 8
      %v608 = vld [vmem:[%s607] sm:$0xf]
      %v610 = vsel %vm359, %v606, 0
      %v613 = vsel %vm359, %v608, 0
      %615 = vmatpush.bf16.xpose.msra.mxu0 0
      %616 = vmatpush.bf16.xpose.msra.mxu0 0
      %617 = vmatpush.bf16.xpose.msra.mxu0 0
      %618 = vmatpush.bf16.xpose.msra.mxu0 0
      %619 = vmatpush.bf16.xpose.msra.mxu0 0
      %620 = vmatpush.bf16.xpose.msra.mxu0 0
      %621 = vmatpush.bf16.xpose.msra.mxu0 0
      %622 = vmatpush.bf16.xpose.msra.mxu0 %v613
      %623 = vmatmul.bf16.gmra.mxu0 %v610
      %v624 = vpop.f32.mrf.mxu0
      %v625 = vadd.f32 0.0, %v624
      %v626 = vpop.f32.mrf.mxu0
      %627 = vdwg.mxu0
      %v628 = vsel %vm350, %v625, 0.0
      %v629 = vpack.c.bf16 %v628, %v628
      %s630 = scalar_lea.vmem %s313, 8
      %v631 = vld [vmem:[%s630] sm:$0xf]
      %v633 = vsel %vm382, %v629, 0
      %v636 = vsel %vm386, %v631, 0
      %638 = vmatpush.bf16.msra.mxu0 0
      %639 = vmatpush.bf16.msra.mxu0 0
      %640 = vmatpush.bf16.msra.mxu0 0
      %641 = vmatpush.bf16.msra.mxu0 0
      %642 = vmatpush.bf16.msra.mxu0 0
      %643 = vmatpush.bf16.msra.mxu0 0
      %644 = vmatpush.bf16.msra.mxu0 0
      %645 = vmatpush.bf16.msra.mxu0 %v636
      %646 = vmatmul.bf16.gmra.mxu0 %v633
      %v647 = vpop.f32.mrf.mxu0
      %v648 = vadd.f32 0.0, %v647
      %v649 = vpop.f32.mrf.mxu0
      %650 = vdwg.mxu0
      %651 = vmatpush.bf16.msra.mxu0 0
      %652 = vmatpush.bf16.msra.mxu0 0
      %653 = vmatpush.bf16.msra.mxu0 0
      %654 = vmatpush.bf16.msra.mxu0 0
      %655 = vmatpush.bf16.msra.mxu0 0
      %656 = vmatpush.bf16.msra.mxu0 0
      %657 = vmatpush.bf16.msra.mxu0 %v604
      %658 = vmatpush.bf16.msra.mxu0 %v603
      %659 = vmatmul.bf16.gmra.mxu0 %v610
      %v660 = vpop.f32.mrf.mxu0
      %v661 = vadd.f32 %v648, %v660
      %v662 = vpop.f32.mrf.mxu0
      %663 = vdwg.mxu0
      %v664 = vmax.f32 %v661, 0.0001
      %v665 = vrcp.pop %v664
      %667 = vset.pattern.permute.xlu0 8
      %668 = vperm.xlu0 %667, %v665
      %v669 = vpop.permute.xlu0 %668
      %v671 = vmul.f32 %v661, %v669
      %v672 = vpack.c.bf16 %v671, %v671
      %673 = vxpose.xlu0.c.b16.start [1/8] %v608, 128
      %674 = vxpose.xlu0.c.b16.cont [2/8] 0, 128
      %675 = vxpose.xlu0.c.b16.cont [3/8] 0, 128
      %676 = vxpose.xlu0.c.b16.cont [4/8] 0, 128
      %677 = vxpose.xlu0.c.b16.cont [5/8] 0, 128
      %678 = vxpose.xlu0.c.b16.cont [6/8] 0, 128
      %679 = vxpose.xlu0.c.b16.cont [7/8] 0, 128
      %680 = vxpose.xlu0.c.b16.end [8/8] 0, 128
      %v681 = vpop.trf.xlu0
      %v682 = vpop.trf.xlu0
      %v683 = vpop.trf.xlu0
      %v684 = vpop.trf.xlu0
      %v685 = vpop.trf.xlu0
      %v686 = vpop.trf.xlu0
      %v687 = vpop.trf.xlu0
      %v688 = vpop.trf.xlu0
      %v690 = vsel %vm382, %v681, 0
      %v693 = vsel %vm382, %v682, 0
      %695 = vmatpush.bf16.msra.mxu0 0
      %696 = vmatpush.bf16.msra.mxu0 0
      %697 = vmatpush.bf16.msra.mxu0 0
      %698 = vmatpush.bf16.msra.mxu0 0
      %699 = vmatpush.bf16.msra.mxu0 0
      %700 = vmatpush.bf16.msra.mxu0 0
      %701 = vmatpush.bf16.msra.mxu0 0
      %702 = vmatpush.bf16.msra.mxu0 %v636
      %703 = vmatmul.bf16.gmra.mxu0 %v690
      %v704 = vpop.f32.mrf.mxu0
      %v705 = vadd.f32 0.0, %v704
      %v706 = vpop.f32.mrf.mxu0
      %v707 = vadd.f32 0.0, %v706
      %708 = vmatmul.bf16.gmra.mxu0 %v693
      %v709 = vpop.f32.mrf.mxu0
      %v710 = vadd.f32 0.0, %v709
      %v711 = vpop.f32.mrf.mxu0
      %v712 = vadd.f32 0.0, %v711
      %713 = vdwg.mxu0
      %v714 = vadd.f32 %v599, %v705
      %v715 = vadd.f32 %v600, %v707
      %v716 = vadd.f32 %v601, %v710
      %v717 = vadd.f32 %v602, %v712
      %718 = vst [vmem:[%s598] sm:$0xff] %v714
      %719 = vst [vmem:[%s598 + $0x8] sm:$0xff] %v715
      %720 = vst [vmem:[%s598 + $0x10] sm:$0xff] %v716
      %721 = vst [vmem:[%s598 + $0x18] sm:$0xff] %v717
      %s722 = scalar_lea.vmem [#allocation2], 96
      %v723 = vld [vmem:[%s722] sm:$0xff]
      %v724 = vld [vmem:[%s722 + $0x8] sm:$0xff]
      %v725 = vld [vmem:[%s722 + $0x10] sm:$0xff]
      %v726 = vld [vmem:[%s722 + $0x18] sm:$0xff]
      %v727 = vpack.c.bf16 %v724, %v723
      %v728 = vpack.c.bf16 %v726, %v725
      %s729 = scalar_lea.vmem %s287, 12
      %v730 = vld [vmem:[%s729] sm:$0xf]
      %s731 = scalar_lea.vmem %s300, 12
      %v732 = vld [vmem:[%s731] sm:$0xf]
      %v734 = vsel %vm359, %v730, 0
      %v737 = vsel %vm359, %v732, 0
      %739 = vmatpush.bf16.xpose.msra.mxu0 0
      %740 = vmatpush.bf16.xpose.msra.mxu0 0
      %741 = vmatpush.bf16.xpose.msra.mxu0 0
      %742 = vmatpush.bf16.xpose.msra.mxu0 0
      %743 = vmatpush.bf16.xpose.msra.mxu0 0
      %744 = vmatpush.bf16.xpose.msra.mxu0 0
      %745 = vmatpush.bf16.xpose.msra.mxu0 0
      %746 = vmatpush.bf16.xpose.msra.mxu0 %v737
      %747 = vmatmul.bf16.gmra.mxu0 %v734
      %v748 = vpop.f32.mrf.mxu0
      %v749 = vadd.f32 0.0, %v748
      %v750 = vpop.f32.mrf.mxu0
      %751 = vdwg.mxu0
      %v752 = vsel %vm350, %v749, 0.0
      %v753 = vpack.c.bf16 %v752, %v752
      %s754 = scalar_lea.vmem %s313, 12
      %v755 = vld [vmem:[%s754] sm:$0xf]
      %v757 = vsel %vm382, %v753, 0
      %v760 = vsel %vm386, %v755, 0
      %762 = vmatpush.bf16.msra.mxu0 0
      %763 = vmatpush.bf16.msra.mxu0 0
      %764 = vmatpush.bf16.msra.mxu0 0
      %765 = vmatpush.bf16.msra.mxu0 0
      %766 = vmatpush.bf16.msra.mxu0 0
      %767 = vmatpush.bf16.msra.mxu0 0
      %768 = vmatpush.bf16.msra.mxu0 0
      %769 = vmatpush.bf16.msra.mxu0 %v760
      %770 = vmatmul.bf16.gmra.mxu0 %v757
      %v771 = vpop.f32.mrf.mxu0
      %v772 = vadd.f32 0.0, %v771
      %v773 = vpop.f32.mrf.mxu0
      %774 = vdwg.mxu0
      %775 = vmatpush.bf16.msra.mxu0 0
      %776 = vmatpush.bf16.msra.mxu0 0
      %777 = vmatpush.bf16.msra.mxu0 0
      %778 = vmatpush.bf16.msra.mxu0 0
      %779 = vmatpush.bf16.msra.mxu0 0
      %780 = vmatpush.bf16.msra.mxu0 0
      %781 = vmatpush.bf16.msra.mxu0 %v728
      %782 = vmatpush.bf16.msra.mxu0 %v727
      %783 = vmatmul.bf16.gmra.mxu0 %v734
      %v784 = vpop.f32.mrf.mxu0
      %v785 = vadd.f32 %v772, %v784
      %v786 = vpop.f32.mrf.mxu0
      %787 = vdwg.mxu0
      %v788 = vmax.f32 %v785, 0.0001
      %v789 = vrcp.pop %v788
      %791 = vset.pattern.permute.xlu0 8
      %792 = vperm.xlu0 %791, %v789
      %v793 = vpop.permute.xlu0 %792
      %v795 = vmul.f32 %v785, %v793
      %v796 = vpack.c.bf16 %v795, %v795
      %797 = vxpose.xlu0.c.b16.start [1/8] %v732, 128
      %798 = vxpose.xlu0.c.b16.cont [2/8] 0, 128
      %799 = vxpose.xlu0.c.b16.cont [3/8] 0, 128
      %800 = vxpose.xlu0.c.b16.cont [4/8] 0, 128
      %801 = vxpose.xlu0.c.b16.cont [5/8] 0, 128
      %802 = vxpose.xlu0.c.b16.cont [6/8] 0, 128
      %803 = vxpose.xlu0.c.b16.cont [7/8] 0, 128
      %804 = vxpose.xlu0.c.b16.end [8/8] 0, 128
      %v805 = vpop.trf.xlu0
      %v806 = vpop.trf.xlu0
      %v807 = vpop.trf.xlu0
      %v808 = vpop.trf.xlu0
      %v809 = vpop.trf.xlu0
      %v810 = vpop.trf.xlu0
      %v811 = vpop.trf.xlu0
      %v812 = vpop.trf.xlu0
      %v814 = vsel %vm382, %v805, 0
      %v817 = vsel %vm382, %v806, 0
      %819 = vmatpush.bf16.msra.mxu0 0
      %820 = vmatpush.bf16.msra.mxu0 0
      %821 = vmatpush.bf16.msra.mxu0 0
      %822 = vmatpush.bf16.msra.mxu0 0
      %823 = vmatpush.bf16.msra.mxu0 0
      %824 = vmatpush.bf16.msra.mxu0 0
      %825 = vmatpush.bf16.msra.mxu0 0
      %826 = vmatpush.bf16.msra.mxu0 %v760
      %827 = vmatmul.bf16.gmra.mxu0 %v814
      %v828 = vpop.f32.mrf.mxu0
      %v829 = vadd.f32 0.0, %v828
      %v830 = vpop.f32.mrf.mxu0
      %v831 = vadd.f32 0.0, %v830
      %832 = vmatmul.bf16.gmra.mxu0 %v817
      %v833 = vpop.f32.mrf.mxu0
      %v834 = vadd.f32 0.0, %v833
      %v835 = vpop.f32.mrf.mxu0
      %v836 = vadd.f32 0.0, %v835
      %837 = vdwg.mxu0
      %v838 = vadd.f32 %v723, %v829
      %v839 = vadd.f32 %v724, %v831
      %v840 = vadd.f32 %v725, %v834
      %v841 = vadd.f32 %v726, %v836
      %842 = vst [vmem:[%s722] sm:$0xff] %v838
      %843 = vst [vmem:[%s722 + $0x8] sm:$0xff] %v839
      %844 = vst [vmem:[%s722 + $0x10] sm:$0xff] %v840
      %845 = vst [vmem:[%s722 + $0x18] sm:$0xff] %v841
      %v847 = vunpack.c.l.b16 %v548
      %v848 = vpack.c.b16 %v847, %v847
      %849 = vrot.lane.b32.xlu0 %v848, 8
      %v850 = vpop.permute.xlu0 %849
      %v852 = vunpack.c.l.b16 %v672
      %v853 = vpack.c.b16 %v852, %v852
      %854 = vrot.lane.b32.xlu0 %v853, 16
      %v855 = vpop.permute.xlu0 %854
      %v857 = vunpack.c.l.b16 %v796
      %v858 = vpack.c.b16 %v857, %v857
      %859 = vrot.lane.b32.xlu0 %v858, 24
      %v860 = vpop.permute.xlu0 %859
      %v863 = vsel %vm382, %v424, %v850
      %vm864 = vcmask 130048
      %v866 = vsel %vm864, %v863, %v855
      %vm867 = vcmask 195584
      %v869 = vsel %vm867, %v866, %v860
      %vm871 = vcmask 257024
      %872 = vst.msk [vmem:[%s324] sm:$0xf] %vm871, %v869
      %p873 = scmp.lt.s32.totalorder %s19, 1
      %s874 = scalar_select %p873, %s19, 1
      %p875 = scmp.lt.s32.totalorder %s21, 0
      %s876 = scalar_select %p875, %s21, 0
      %p877 = scmp.lt.s32.totalorder %s20, 0
      %s878 = scalar_select %p877, %s20, 0
      %s879 = sadd.s32 %s878, %s876
      %s880 = sadd.s32 %s879, %s874
      %s881 = smul.addr %s880, 4
      %s882 = scalar_lea.vmem %s3, %s881
      // Predicated region
      $region37: #{causal_attention_forward.1} parent=31 // pred_check
        %p883 = pneg %p145
      $region38: #{causal_attention_forward.1} parent=31 // pred_check_branch
        %885 = sbr.rel (%p883) target = $region40
      $region39: #{causal_attention_forward.1} parent=31 // pred_region
        _
      $region40: #{causal_attention_forward.1} parent=31 // pred_fallthru
        _
    $region32: #{causal_attention_forward.1} parent=5 // pred_fallthru
      _
    %p886 = scmp.le.s32.totalorder 2, %s9
    // Predicated region
    $region41: #{causal_attention_forward.1} parent=5 // pred_check
      %p887 = pneg %p886
    $region42: #{causal_attention_forward.1} parent=5 // pred_check_branch
      %889 = sbr.rel (%p887) target = $region44
    $region43: #{causal_attention_forward.1} parent=5 // pred_region
      %s890 = ssub.s32 %s9, 2
      // Predicated region
      $region45: #{causal_attention_forward.1} parent=43 // pred_check
        %p891 = pneg %p151
      $region46: #{causal_attention_forward.1} parent=43 // pred_check_branch
        %893 = sbr.rel (%p891) target = $region48
      $region47: #{causal_attention_forward.1} parent=43 // pred_region
        %p894 = scmp.lt.s32.totalorder %s22, 1
        %s895 = scalar_select %p894, %s22, 1
        %p896 = scmp.lt.s32.totalorder %s24, 0
        %s897 = scalar_select %p896, %s24, 0
        %p898 = scmp.lt.s32.totalorder %s23, 0
        %s899 = scalar_select %p898, %s23, 0
        %s900 = sadd.s32 %s899, %s897
        %s901 = sadd.s32 %s900, %s895
        %s902 = smul.addr %s901, 4
        %s903 = scalar_lea.vmem %s3, %s902
      $region48: #{causal_attention_forward.1} parent=43 // pred_fallthru
        _
    $region44: #{causal_attention_forward.1} parent=5 // pred_fallthru
      _
  $region6: #{causal_attention_forward.1} parent=0 // loop_footer
    %s13 = sadd.s32 1, %s9
  $region7: #{causal_attention_forward.1} parent=0 // loop_footer_branch
    %8 = sbr.rel target = $region3
  $region8: #{causal_attention_forward.1} parent=0 // loop_exit
    _

</llo_original>
